<compile_context>
chip_gen: v7x
topology: tpu7x:2x2x1
jax: 0.10.0
libtpu: 0.0.40
codegen_flags: <defaults>
</compile_context>

<pallas_src>
import math
import jax
import jax.numpy as jnp
from jax.experimental import pallas as pl
from jax.experimental.pallas import tpu as pltpu

NEG_SLOPE = 0.2          # FusedLeakyReLU default negative_slope
SCALE = math.sqrt(2.0)   # FusedLeakyReLU default scale


def _make_conv_flrelu_kernel(kH, kW, W, HW, NCin):
    """Kernel: build shifted-tap matrix in VMEM scratch, one MXU dot, bias+act."""

    def kernel(x_ref, w_ref, b_ref, o_ref, taps_ref):
        # x_ref:    (N*Cin, H*W)            lane-dense flattened images   (VMEM)
        # w_ref:    (N*Cout, kH*kW*N*Cin)   block-diagonal packed weights (VMEM)
        # b_ref:    (N*Cout, 1)             conv bias + FLR bias, summed  (VMEM)
        # o_ref:    (N*Cout, H*W)           lane-dense full-frame output  (VMEM)
        # taps_ref: (kH*kW*N*Cin, H*W)      shifted-copy scratch          (VMEM)
        x = x_ref[...].astype(jnp.float32)                    # (NCin, HW)

        t = 0
        for kh in range(kH):
            for kw in range(kW):
                s = kh * W + kw
                # shifted[c, m] == x[c, (m + s) mod HW]: static lane rotation on
                # the XLU; wrapped positions are outside the valid conv window
                # and get cropped by the wrapper.
                xt = x if s == 0 else pltpu.roll(x, shift=HW - s, axis=1)
                taps_ref[pl.ds(t * NCin, NCin), :] = xt        # static, 8-row aligned
                t += 1

        # One MXU contraction: (N*Cout, KK*NCin) x (KK*NCin, HW) -> (N*Cout, HW)
        acc = jnp.dot(w_ref[...], taps_ref[...],
                      preferred_element_type=jnp.float32,
                      precision=jax.lax.Precision.HIGHEST)

        acc = acc + b_ref[...]                                 # (N*Cout, 1) lane-bcast
        # FusedLeakyReLU: sqrt(2) * leaky_relu(conv + bias, 0.2)
        y = jnp.where(acc >= 0, acc, NEG_SLOPE * acc) * jnp.float32(SCALE)
        o_ref[...] = y.astype(o_ref.dtype)

    return kernel


def _pack_params(weight_oihw, conv_bias, flr_bias, batch):
    """One-time per-layer packing: block-diagonal weights + fused bias column."""
    Cout, Cin, kH, kW = weight_oihw.shape
    KK = kH * kW
    # (kH, kW, Cout, Cin) -> (KK, Cout, Cin), tap index t = kh*kW + kw
    w_taps = jnp.transpose(weight_oihw.astype(jnp.float32), (2, 3, 0, 1))
    w_taps = w_taps.reshape(KK, Cout, Cin)
    # Block-diagonal over the batch: w_bd[n*Cout+co, t*(N*Cin) + n*Cin + ci]
    #   = weight[co, ci, kh, kw]   (zero for the other image's columns)
    w_bd = jnp.zeros((batch, Cout, KK, batch, Cin), jnp.float32)
    idx = jnp.arange(batch)
    w_bd = w_bd.at[idx, :, :, idx, :].set(
        jnp.transpose(w_taps, (1, 0, 2))[None])               # (Cout, KK, Cin)
    w_bd = w_bd.reshape(batch * Cout, KK * batch * Cin)
    b = (conv_bias + flr_bias).astype(jnp.float32)
    b_col = jnp.tile(b, batch).reshape(batch * Cout, 1)
    return w_bd, b_col


def offsets_feature_shift_conv(x_nchw, w_bd, b_col, kernel_size):
    """Conv2d (stride 1, no padding) + FusedLeakyReLU.  NCHW in / NCHW out."""
    N, Cin, H, W = x_nchw.shape
    kH = kW = kernel_size
    Ho, Wo = H - kH + 1, W - kW + 1
    HW = H * W
    NCin = N * Cin
    NCout = b_col.shape[0]
    Cout = NCout // N
    KKNC = kH * kW * NCin

    # Free reshape: collapse contiguous dims (no HBM round trip).
    x2d = x_nchw.reshape(NCin, HW)

    out_full = pl.pallas_call(
        _make_conv_flrelu_kernel(kH, kW, W, HW, NCin),
        out_shape=jax.ShapeDtypeStruct((NCout, HW), x_nchw.dtype),
        grid=(1,),
        in_specs=[
            pl.BlockSpec((NCin, HW), lambda i: (0, 0)),
            pl.BlockSpec((NCout, KKNC), lambda i: (0, 0)),
            pl.BlockSpec((NCout, 1), lambda i: (0, 0)),
        ],
        out_specs=pl.BlockSpec((NCout, HW), lambda i: (0, 0)),
        scratch_shapes=[pltpu.VMEM((KKNC, HW), jnp.float32)],
        compiler_params=pltpu.CompilerParams(
            dimension_semantics=("arbitrary",)),
    )(x2d, w_bd, b_col)

    # Crop to the valid conv window (free reshape + small slice); this discards
    # every position whose roll-based shift wrapped around a row/image boundary.
    return out_full.reshape(N, Cout, H, W)[:, :, :Ho, :Wo]


def _reference(x, w, b_conv, b_flr):
    y = jax.lax.conv_general_dilated(
        x, w, window_strides=(1, 1), padding="VALID",
        dimension_numbers=("NCHW", "OIHW", "NCHW"),
        precision=jax.lax.Precision.HIGHEST)
    y = y + b_conv[None, :, None, None] + b_flr[None, :, None, None]
    return jnp.where(y >= 0, y, NEG_SLOPE * y) * SCALE


if __name__ == "__main__":
    key = jax.random.PRNGKey(0)
    k_x, k_w, k_bc, k_bf = jax.random.split(key, 4)

    N, Cin, Cout, H, W, K = 2, 4, 8, 16, 16, 3
    x = jax.random.normal(k_x, (N, Cin, H, W), jnp.float32)

    # Deterministic synthetic parameters (shapes match nn.Conv2d + FusedLeakyReLU).
    fan_in = Cin * K * K
    bound = 1.0 / math.sqrt(fan_in)
    weight = jax.random.uniform(k_w, (Cout, Cin, K, K), jnp.float32, -bound, bound)
    conv_bias = jax.random.uniform(k_bc, (Cout,), jnp.float32, -bound, bound)
    # FusedLeakyReLU bias initializes to zeros; add a small deterministic offset
    # so the fused-bias path is actually exercised.
    flr_bias = 0.01 * jnp.arange(Cout, dtype=jnp.float32)

    # One-time per-layer packing (hoisted out of the forward pass).
    w_bd, b_col = _pack_params(weight, conv_bias, flr_bias, N)

    fwd = jax.jit(lambda xx, ww, bb: offsets_feature_shift_conv(xx, ww, bb, K))
    out = jax.block_until_ready(fwd(x, w_bd, b_col))

    ref = _reference(x, weight, conv_bias, flr_bias)
    assert out.shape == (N, Cout, H - K + 1, W - K + 1), out.shape
    assert jnp.allclose(out, ref, rtol=1e-4, atol=1e-4), \
        float(jnp.max(jnp.abs(out - ref)))
    print("KERNEL_OK")
</pallas_src>

<mosaic_0001>
module attributes {stable_mosaic.version = 11 : i64} {
  func.func @kernel(%arg0: i32, %arg1: memref<8x256xf32, #tpu.memory_space<vmem>>, %arg2: memref<16x72xf32, #tpu.memory_space<vmem>>, %arg3: memref<16x1xf32, #tpu.memory_space<vmem>>, %arg4: memref<16x256xf32, #tpu.memory_space<vmem>>, %arg5: memref<72x256xf32, #tpu.memory_space<vmem>>) attributes {dimension_semantics = [#tpu.dimension_semantics<arbitrary>], iteration_bounds = array<i64: 1>, scalar_prefetch = 0 : i64, scratch_operands = 1 : i64, tpu.core_type = #tpu.core_type<tc>, window_params = [{pipeline_mode = #tpu.pipeline_mode<synchronous>, transform_indices = @transform_0, window_bounds = array<i64: 8, 256>}, {pipeline_mode = #tpu.pipeline_mode<synchronous>, transform_indices = @transform_1, window_bounds = array<i64: 16, 72>}, {pipeline_mode = #tpu.pipeline_mode<synchronous>, transform_indices = @transform_2, window_bounds = array<i64: 16, 1>}, {pipeline_mode = #tpu.pipeline_mode<synchronous>, transform_indices = @transform_3, window_bounds = array<i64: 16, 256>}]} {
    %c0 = arith.constant 0 : index
    %c0_0 = arith.constant 0 : index
    %0 = vector.load %arg1[%c0, %c0_0] : memref<8x256xf32, #tpu.memory_space<vmem>>, vector<8x256xf32>
    %c0_1 = arith.constant 0 : index
    %c0_2 = arith.constant 0 : index
    %1 = vector.load %arg5[%c0_1, %c0_2] : memref<72x256xf32, #tpu.memory_space<vmem>>, vector<8x256xf32>
    tpu.vector_store %arg5[%c0_1, %c0_2], %0 {strides = array<i32>} : memref<72x256xf32, #tpu.memory_space<vmem>>, vector<8x256xf32>,
    %c255_i32 = arith.constant 255 : i32
    %2 = tpu.dynamic_rotate %0 by %c255_i32 dim 1 : vector<8x256xf32>, i32 -> vector<8x256xf32>
    %c8 = arith.constant 8 : index
    %c0_3 = arith.constant 0 : index
    %3 = vector.load %arg5[%c8, %c0_3] : memref<72x256xf32, #tpu.memory_space<vmem>>, vector<8x256xf32>
    tpu.vector_store %arg5[%c8, %c0_3], %2 {strides = array<i32>} : memref<72x256xf32, #tpu.memory_space<vmem>>, vector<8x256xf32>,
    %c254_i32 = arith.constant 254 : i32
    %4 = tpu.dynamic_rotate %0 by %c254_i32 dim 1 : vector<8x256xf32>, i32 -> vector<8x256xf32>
    %c16 = arith.constant 16 : index
    %c0_4 = arith.constant 0 : index
    %5 = vector.load %arg5[%c16, %c0_4] : memref<72x256xf32, #tpu.memory_space<vmem>>, vector<8x256xf32>
    tpu.vector_store %arg5[%c16, %c0_4], %4 {strides = array<i32>} : memref<72x256xf32, #tpu.memory_space<vmem>>, vector<8x256xf32>,
    %c240_i32 = arith.constant 240 : i32
    %6 = tpu.dynamic_rotate %0 by %c240_i32 dim 1 : vector<8x256xf32>, i32 -> vector<8x256xf32>
    %c24 = arith.constant 24 : index
    %c0_5 = arith.constant 0 : index
    %7 = vector.load %arg5[%c24, %c0_5] : memref<72x256xf32, #tpu.memory_space<vmem>>, vector<8x256xf32>
    tpu.vector_store %arg5[%c24, %c0_5], %6 {strides = array<i32>} : memref<72x256xf32, #tpu.memory_space<vmem>>, vector<8x256xf32>,
    %c239_i32 = arith.constant 239 : i32
    %8 = tpu.dynamic_rotate %0 by %c239_i32 dim 1 : vector<8x256xf32>, i32 -> vector<8x256xf32>
    %c32 = arith.constant 32 : index
    %c0_6 = arith.constant 0 : index
    %9 = vector.load %arg5[%c32, %c0_6] : memref<72x256xf32, #tpu.memory_space<vmem>>, vector<8x256xf32>
    tpu.vector_store %arg5[%c32, %c0_6], %8 {strides = array<i32>} : memref<72x256xf32, #tpu.memory_space<vmem>>, vector<8x256xf32>,
    %c238_i32 = arith.constant 238 : i32
    %10 = tpu.dynamic_rotate %0 by %c238_i32 dim 1 : vector<8x256xf32>, i32 -> vector<8x256xf32>
    %c40 = arith.constant 40 : index
    %c0_7 = arith.constant 0 : index
    %11 = vector.load %arg5[%c40, %c0_7] : memref<72x256xf32, #tpu.memory_space<vmem>>, vector<8x256xf32>
    tpu.vector_store %arg5[%c40, %c0_7], %10 {strides = array<i32>} : memref<72x256xf32, #tpu.memory_space<vmem>>, vector<8x256xf32>,
    %c224_i32 = arith.constant 224 : i32
    %12 = tpu.dynamic_rotate %0 by %c224_i32 dim 1 : vector<8x256xf32>, i32 -> vector<8x256xf32>
    %c48 = arith.constant 48 : index
    %c0_8 = arith.constant 0 : index
    %13 = vector.load %arg5[%c48, %c0_8] : memref<72x256xf32, #tpu.memory_space<vmem>>, vector<8x256xf32>
    tpu.vector_store %arg5[%c48, %c0_8], %12 {strides = array<i32>} : memref<72x256xf32, #tpu.memory_space<vmem>>, vector<8x256xf32>,
    %c223_i32 = arith.constant 223 : i32
    %14 = tpu.dynamic_rotate %0 by %c223_i32 dim 1 : vector<8x256xf32>, i32 -> vector<8x256xf32>
    %c56 = arith.constant 56 : index
    %c0_9 = arith.constant 0 : index
    %15 = vector.load %arg5[%c56, %c0_9] : memref<72x256xf32, #tpu.memory_space<vmem>>, vector<8x256xf32>
    tpu.vector_store %arg5[%c56, %c0_9], %14 {strides = array<i32>} : memref<72x256xf32, #tpu.memory_space<vmem>>, vector<8x256xf32>,
    %c222_i32 = arith.constant 222 : i32
    %16 = tpu.dynamic_rotate %0 by %c222_i32 dim 1 : vector<8x256xf32>, i32 -> vector<8x256xf32>
    %c64 = arith.constant 64 : index
    %c0_10 = arith.constant 0 : index
    %17 = vector.load %arg5[%c64, %c0_10] : memref<72x256xf32, #tpu.memory_space<vmem>>, vector<8x256xf32>
    tpu.vector_store %arg5[%c64, %c0_10], %16 {strides = array<i32>} : memref<72x256xf32, #tpu.memory_space<vmem>>, vector<8x256xf32>,
    %c0_11 = arith.constant 0 : index
    %c0_12 = arith.constant 0 : index
    %18 = vector.load %arg2[%c0_11, %c0_12] : memref<16x72xf32, #tpu.memory_space<vmem>>, vector<16x72xf32>
    %c0_13 = arith.constant 0 : index
    %c0_14 = arith.constant 0 : index
    %19 = vector.load %arg5[%c0_13, %c0_14] : memref<72x256xf32, #tpu.memory_space<vmem>>, vector<72x256xf32>
    %cst = arith.constant dense<0.000000e+00> : vector<16x256xf32>
    %20 = tpu.matmul %18, %19, %cst {dimension_numbers = #tpu.dot_dimension_numbers<[1], [0], [0], [1], [0, 0, 1, 1], [], []>, precision = #tpu.contract_precision<fp32>} : vector<16x72xf32>, vector<72x256xf32>, vector<16x256xf32> -> vector<16x256xf32>
    %c0_15 = arith.constant 0 : index
    %c0_16 = arith.constant 0 : index
    %21 = vector.load %arg3[%c0_15, %c0_16] : memref<16x1xf32, #tpu.memory_space<vmem>>, vector<16x1xf32>
    %22 = vector.broadcast %21 : vector<16x1xf32> to vector<16x256xf32>
    %23 = arith.addf %20, %22 : vector<16x256xf32>
    %cst_17 = arith.constant 0.000000e+00 : f32
    %24 = vector.broadcast %cst_17 : f32 to vector<16x256xf32>
    %25 = arith.cmpf oge, %23, %24 : vector<16x256xf32>
    %cst_18 = arith.constant 2.000000e-01 : f32
    %26 = vector.broadcast %cst_18 : f32 to vector<16x256xf32>
    %27 = arith.mulf %26, %23 : vector<16x256xf32>
    %28 = arith.select %25, %23, %27 : vector<16x256xi1>, vector<16x256xf32>
    %cst_19 = arith.constant 1.41421354 : f32
    %29 = vector.broadcast %cst_19 : f32 to vector<16x256xf32>
    %30 = arith.mulf %28, %29 : vector<16x256xf32>
    %c0_20 = arith.constant 0 : index
    %c0_21 = arith.constant 0 : index
    %31 = vector.load %arg4[%c0_20, %c0_21] : memref<16x256xf32, #tpu.memory_space<vmem>>, vector<16x256xf32>
    tpu.vector_store %arg4[%c0_20, %c0_21], %30 {strides = array<i32>} : memref<16x256xf32, #tpu.memory_space<vmem>>, vector<16x256xf32>,
    return
  }
  func.func @transform_0(%arg0: i32) -> (i32, i32) {
    %c0_i32 = arith.constant 0 : i32
    %c0_i32_0 = arith.constant 0 : i32
    %c0_i32_1 = arith.constant 0 : i32
    return %c0_i32, %c0_i32_0 : i32, i32
  }
  func.func @transform_1(%arg0: i32) -> (i32, i32) {
    %c0_i32 = arith.constant 0 : i32
    %c0_i32_0 = arith.constant 0 : i32
    %c0_i32_1 = arith.constant 0 : i32
    return %c0_i32, %c0_i32_0 : i32, i32
  }
  func.func @transform_2(%arg0: i32) -> (i32, i32) {
    %c0_i32 = arith.constant 0 : i32
    %c0_i32_0 = arith.constant 0 : i32
    %c0_i32_1 = arith.constant 0 : i32
    return %c0_i32, %c0_i32_0 : i32, i32
  }
  func.func @transform_3(%arg0: i32) -> (i32, i32) {
    %c0_i32 = arith.constant 0 : i32
    %c0_i32_0 = arith.constant 0 : i32
    %c0_i32_1 = arith.constant 0 : i32
    return %c0_i32, %c0_i32_0 : i32, i32
  }
}

</mosaic_0001>

<llo_original>
// kernel: _lambda_.1
$region0: #{_lambda_.1}
  #allocation0 [shape = 'u32[]', space=smem, size = 0x4, offset = 0x4, fixed_abs, tag = 'smem constant byte address 0x4 - core index']
  #allocation1 [shape = 'u32[144,128]{1,0:T(1,128)}', space=vmem, size = 0x12000, scoped, tag = 'internal scratch']
  #allocation2 [shape = 'f32[72,256]{1,0:T(8,128)}', space=vmem, size = 0x12000, scoped, tag = 'scratch operand']
  %s0 = inlined_call_operand.vmem [shape: f32[8,256], index: 0, kind: input, shape index: {}]
  %s1 = inlined_call_operand.vmem [shape: f32[16,72], index: 1, kind: input, shape index: {}]
  %s2 = inlined_call_operand.vmem [shape: f32[16,1], index: 2, kind: input, shape index: {}]
  %s3 = inlined_call_operand.vmem [shape: f32[16,256], index: 3, kind: output, shape index: {}]
  %s4 = sld [smem:[#allocation0]]
  $region22: #{_lambda_.1} parent=0
    _
  %s6 = ssub.s32 1, %s4
  %s7 = scalar_select 0, %s6, %s4
  // Predicated region
  $region2: #{_lambda_.1} parent=0 // pred_check
    _
  $region3: #{_lambda_.1} parent=0 // pred_check_branch
    %9 = sbr.rel (0) target = $region5
  $region4: #{_lambda_.1} parent=0 // pred_region
    _
  $region5: #{_lambda_.1} parent=0 // pred_fallthru
    _
  // Predicated region
  $region6: #{_lambda_.1} parent=0 // pred_check
    _
  $region7: #{_lambda_.1} parent=0 // pred_check_branch
    %11 = sbr.rel (0) target = $region9
  $region8: #{_lambda_.1} parent=0 // pred_region
    _
  $region9: #{_lambda_.1} parent=0 // pred_fallthru
    _
  // Predicated region
  $region10: #{_lambda_.1} parent=0 // pred_check
    _
  $region11: #{_lambda_.1} parent=0 // pred_check_branch
    %13 = sbr.rel (0) target = $region13
  $region12: #{_lambda_.1} parent=0 // pred_region
    _
  $region13: #{_lambda_.1} parent=0 // pred_fallthru
    _
  %v14 = vld [vmem:[%s0] sm:$0xff]
  %v15 = vld [vmem:[%s0 + $0x8] sm:$0xff]
  %16 = vst [vmem:[#allocation2] sm:$0xff] %v14
  %17 = vst [vmem:[#allocation2 + $0x8] sm:$0xff] %v15
  %18 = vrot.lane.b32.xlu0 %v14, 127
  %v19 = vpop.permute.xlu0 %18
  %20 = vrot.lane.b32.xlu0 %v15, 127
  %v21 = vpop.permute.xlu0 %20
  %v22 = vlaneseq
  %v23 = vand.u32 %v22, 127
  %vm24 = vcmp.lt.s32.totalorder %v23, 127
  %v25 = vsel %vm24, %v19, %v21
  %v26 = vsel %vm24, %v21, %v19
  %27 = vst [vmem:[#allocation2 + $0x10] sm:$0xff] %v25
  %28 = vst [vmem:[#allocation2 + $0x18] sm:$0xff] %v26
  %29 = vrot.lane.b32.xlu0 %v14, 126
  %v30 = vpop.permute.xlu0 %29
  %31 = vrot.lane.b32.xlu0 %v15, 126
  %v32 = vpop.permute.xlu0 %31
  %vm33 = vcmp.lt.s32.totalorder %v23, 126
  %v34 = vsel %vm33, %v30, %v32
  %v35 = vsel %vm33, %v32, %v30
  %36 = vst [vmem:[#allocation2 + $0x20] sm:$0xff] %v34
  %37 = vst [vmem:[#allocation2 + $0x28] sm:$0xff] %v35
  %38 = vrot.lane.b32.xlu0 %v14, 112
  %v39 = vpop.permute.xlu0 %38
  %40 = vrot.lane.b32.xlu0 %v15, 112
  %v41 = vpop.permute.xlu0 %40
  %vm42 = vcmp.lt.s32.totalorder %v23, 112
  %v43 = vsel %vm42, %v39, %v41
  %v44 = vsel %vm42, %v41, %v39
  %45 = vst [vmem:[#allocation2 + $0x30] sm:$0xff] %v43
  %46 = vst [vmem:[#allocation2 + $0x38] sm:$0xff] %v44
  %47 = vrot.lane.b32.xlu0 %v14, 111
  %v48 = vpop.permute.xlu0 %47
  %49 = vrot.lane.b32.xlu0 %v15, 111
  %v50 = vpop.permute.xlu0 %49
  %vm51 = vcmp.lt.s32.totalorder %v23, 111
  %v52 = vsel %vm51, %v48, %v50
  %v53 = vsel %vm51, %v50, %v48
  %54 = vst [vmem:[#allocation2 + $0x40] sm:$0xff] %v52
  %55 = vst [vmem:[#allocation2 + $0x48] sm:$0xff] %v53
  %56 = vrot.lane.b32.xlu0 %v14, 110
  %v57 = vpop.permute.xlu0 %56
  %58 = vrot.lane.b32.xlu0 %v15, 110
  %v59 = vpop.permute.xlu0 %58
  %vm60 = vcmp.lt.s32.totalorder %v23, 110
  %v61 = vsel %vm60, %v57, %v59
  %v62 = vsel %vm60, %v59, %v57
  %63 = vst [vmem:[#allocation2 + $0x50] sm:$0xff] %v61
  %64 = vst [vmem:[#allocation2 + $0x58] sm:$0xff] %v62
  %65 = vrot.lane.b32.xlu0 %v14, 96
  %v66 = vpop.permute.xlu0 %65
  %67 = vrot.lane.b32.xlu0 %v15, 96
  %v68 = vpop.permute.xlu0 %67
  %vm69 = vcmp.lt.s32.totalorder %v23, 96
  %v70 = vsel %vm69, %v66, %v68
  %v71 = vsel %vm69, %v68, %v66
  %72 = vst [vmem:[#allocation2 + $0x60] sm:$0xff] %v70
  %73 = vst [vmem:[#allocation2 + $0x68] sm:$0xff] %v71
  %74 = vrot.lane.b32.xlu0 %v14, 95
  %v75 = vpop.permute.xlu0 %74
  %76 = vrot.lane.b32.xlu0 %v15, 95
  %v77 = vpop.permute.xlu0 %76
  %vm78 = vcmp.lt.s32.totalorder %v23, 95
  %v79 = vsel %vm78, %v75, %v77
  %v80 = vsel %vm78, %v77, %v75
  %81 = vst [vmem:[#allocation2 + $0x70] sm:$0xff] %v79
  %82 = vst [vmem:[#allocation2 + $0x78] sm:$0xff] %v80
  %83 = vrot.lane.b32.xlu0 %v14, 94
  %v84 = vpop.permute.xlu0 %83
  %85 = vrot.lane.b32.xlu0 %v15, 94
  %v86 = vpop.permute.xlu0 %85
  %vm87 = vcmp.lt.s32.totalorder %v23, 94
  %v88 = vsel %vm87, %v84, %v86
  %v89 = vsel %vm87, %v86, %v84
  %90 = vst [vmem:[#allocation2 + $0x80] sm:$0xff] %v88
  %91 = vst [vmem:[#allocation2 + $0x88] sm:$0xff] %v89
  %v92 = vld [vmem:[%s1] sm:$0xff]
  %v93 = vld [vmem:[%s1 + $0x8] sm:$0xff]
  %v94 = vld [vmem:[#allocation2] sm:$0xff]
  %v95 = vld [vmem:[#allocation2 + $0x8] sm:$0xff]
  %v96 = vld [vmem:[#allocation2 + $0x10] sm:$0xff]
  %v97 = vld [vmem:[#allocation2 + $0x18] sm:$0xff]
  %v98 = vld [vmem:[#allocation2 + $0x20] sm:$0xff]
  %v99 = vld [vmem:[#allocation2 + $0x28] sm:$0xff]
  %v100 = vld [vmem:[#allocation2 + $0x30] sm:$0xff]
  %v101 = vld [vmem:[#allocation2 + $0x38] sm:$0xff]
  %v102 = vld [vmem:[#allocation2 + $0x40] sm:$0xff]
  %v103 = vld [vmem:[#allocation2 + $0x48] sm:$0xff]
  %v104 = vld [vmem:[#allocation2 + $0x50] sm:$0xff]
  %v105 = vld [vmem:[#allocation2 + $0x58] sm:$0xff]
  %v106 = vld [vmem:[#allocation2 + $0x60] sm:$0xff]
  %v107 = vld [vmem:[#allocation2 + $0x68] sm:$0xff]
  %v108 = vld [vmem:[#allocation2 + $0x70] sm:$0xff]
  %v109 = vld [vmem:[#allocation2 + $0x78] sm:$0xff]
  %v110 = vld [vmem:[#allocation2 + $0x80] sm:$0xff]
  %v111 = vld [vmem:[#allocation2 + $0x88] sm:$0xff]
  %v112 = vld [vmem:[%s2] sm:$0xff]
  %v113 = vld [vmem:[%s2 + $0x8] sm:$0xff]
  %115 = vset.pattern.permute.xlu0 0
  %116 = vperm.xlu0 %115, %v112
  %v117 = vpop.permute.xlu0 %116
  %120 = vset.pattern.permute.xlu0 0
  %121 = vperm.xlu0 %120, %v113
  %v122 = vpop.permute.xlu0 %121
  %vm124 = vcmask 588800
  %v126 = vsel %vm124, %v92, 0
  %v129 = vsel %vm124, %v93, 0
  %v131 = vand.u32 %v95, 4294901760
  %132 = vmatprep.subr.mxu0 %v131
  %v133 = vand.u32 %v94, 4294901760
  %134 = vmatpush1.msra.mxu0 %v133
  %v135 = vand.u32 %v97, 4294901760
  %136 = vmatprep.subr.mxu0 %v135
  %v137 = vand.u32 %v96, 4294901760
  %138 = vmatpush1.msra.mxu0 %v137
  %v139 = vand.u32 %v99, 4294901760
  %140 = vmatprep.subr.mxu0 %v139
  %v141 = vand.u32 %v98, 4294901760
  %142 = vmatpush1.msra.mxu0 %v141
  %v143 = vand.u32 %v101, 4294901760
  %144 = vmatprep.subr.mxu0 %v143
  %v145 = vand.u32 %v100, 4294901760
  %146 = vmatpush1.msra.mxu0 %v145
  %v147 = vand.u32 %v103, 4294901760
  %148 = vmatprep.subr.mxu0 %v147
  %v149 = vand.u32 %v102, 4294901760
  %150 = vmatpush1.msra.mxu0 %v149
  %v151 = vand.u32 %v105, 4294901760
  %152 = vmatprep.subr.mxu0 %v151
  %v153 = vand.u32 %v104, 4294901760
  %154 = vmatpush1.msra.mxu0 %v153
  %v155 = vand.u32 %v107, 4294901760
  %156 = vmatprep.subr.mxu0 %v155
  %v157 = vand.u32 %v106, 4294901760
  %158 = vmatpush1.msra.mxu0 %v157
  %v159 = vand.u32 %v109, 4294901760
  %160 = vmatprep.subr.mxu0 %v159
  %v161 = vand.u32 %v108, 4294901760
  %162 = vmatpush1.msra.mxu0 %v161
  %v163 = vand.u32 %v111, 4294901760
  %164 = vmatprep.subr.mxu0 %v163
  %v165 = vand.u32 %v110, 4294901760
  %166 = vmatpush1.msra.mxu0 %v165
  %167 = vmatprep.subr.mxu0 0.0
  %168 = vmatpush1.msra.mxu0 0.0
  %169 = vmatprep.subr.mxu0 0.0
  %170 = vmatpush1.msra.mxu0 0.0
  %171 = vmatprep.subr.mxu0 0.0
  %172 = vmatpush1.msra.mxu0 0.0
  %173 = vmatprep.subr.mxu0 0.0
  %174 = vmatpush1.msra.mxu0 0.0
  %175 = vmatprep.subr.mxu0 0.0
  %176 = vmatpush1.msra.mxu0 0.0
  %177 = vmatprep.subr.mxu0 0.0
  %178 = vmatpush1.msra.mxu0 0.0
  %179 = vmatprep.subr.mxu0 0.0
  %180 = vmatpush1.msra.mxu0 0.0
  %181 = vmatprep.subr.mxu0 0.0
  %182 = vmatpush1.msra.mxu0 0.0
  %183 = vmatprep.subr.mxu0 0.0
  %184 = vmatpush1.msra.mxu0 0.0
  %185 = vmatprep.subr.mxu0 0.0
  %186 = vmatpush1.msra.mxu0 0.0
  %187 = vmatprep.subr.mxu0 0.0
  %188 = vmatpush1.msra.mxu0 0.0
  %189 = vmatprep.subr.mxu0 0.0
  %190 = vmatpush1.msra.mxu0 0.0
  %191 = vmatprep.subr.mxu0 0.0
  %192 = vmatpush1.msra.mxu0 0.0
  %193 = vmatprep.subr.mxu0 0.0
  %194 = vmatpush1.msra.mxu0 0.0
  %195 = vmatprep.subr.mxu0 0.0
  %196 = vmatpush1.msra.mxu0 0.0
  %197 = vmatprep.subr.mxu0 0.0
  %198 = vmatpush1.msra.mxu0 0.0
  %199 = vmatprep.subr.mxu0 0.0
  %200 = vmatpush1.msra.mxu0 0.0
  %201 = vmatprep.subr.mxu0 0.0
  %202 = vmatpush1.msra.mxu0 0.0
  %203 = vmatprep.subr.mxu0 0.0
  %204 = vmatpush1.msra.mxu0 0.0
  %205 = vmatprep.subr.mxu0 0.0
  %206 = vmatpush1.msra.mxu0 0.0
  %207 = vmatprep.subr.mxu0 0.0
  %208 = vmatpush1.msra.mxu0 0.0
  %209 = vmatprep.subr.mxu0 0.0
  %210 = vmatpush1.msra.mxu0 0.0
  %211 = vmatprep.subr.mxu0 0.0
  %212 = vmatpush1.msra.mxu0 0.0
  %213 = vmatprep.mubr.f32.mxu0 0.0
  %v214 = vand.u32 %v126, 4294901760
  %v215 = vsub.f32 %v126, %v214
  %v216 = vand.u32 %v215, 4294901760
  %v217 = vsub.f32 %v215, %v216
  %v218 = vand.u32 %v217, 4294901760
  %219 = vmatmul.mubr.f32.gmra.mrb[0].mxu0 %v218
  %v220 = vpop.f32.mrb[0].mxu0
  %v221 = vadd.f32 %v117, %v220
  %v222 = vpop.f32.mrb[0].mxu0
  %v223 = vadd.f32 %v117, %v222
  %224 = vmatprep.mubr.f32.mxu0 0.0
  %v225 = vand.u32 %v129, 4294901760
  %v226 = vsub.f32 %v129, %v225
  %v227 = vand.u32 %v226, 4294901760
  %v228 = vsub.f32 %v226, %v227
  %v229 = vand.u32 %v228, 4294901760
  %230 = vmatmul.mubr.f32.gmra.mrb[0].mxu0 %v229
  %v231 = vpop.f32.mrb[0].mxu0
  %v232 = vadd.f32 %v122, %v231
  %v233 = vpop.f32.mrb[0].mxu0
  %v234 = vadd.f32 %v122, %v233
  %235 = vdwg.mxu0
  %v236 = vand.u32 %v95, 4294901760
  %v237 = vsub.f32 %v95, %v236
  %v238 = vand.u32 %v237, 4294901760
  %v239 = vsub.f32 %v237, %v238
  %v240 = vand.u32 %v239, 4294901760
  %241 = vmatprep.subr.mxu0 %v240
  %v242 = vand.u32 %v94, 4294901760
  %v243 = vsub.f32 %v94, %v242
  %v244 = vand.u32 %v243, 4294901760
  %v245 = vsub.f32 %v243, %v244
  %v246 = vand.u32 %v245, 4294901760
  %247 = vmatpush1.msra.mxu0 %v246
  %v248 = vand.u32 %v97, 4294901760
  %v249 = vsub.f32 %v97, %v248
  %v250 = vand.u32 %v249, 4294901760
  %v251 = vsub.f32 %v249, %v250
  %v252 = vand.u32 %v251, 4294901760
  %253 = vmatprep.subr.mxu0 %v252
  %v254 = vand.u32 %v96, 4294901760
  %v255 = vsub.f32 %v96, %v254
  %v256 = vand.u32 %v255, 4294901760
  %v257 = vsub.f32 %v255, %v256
  %v258 = vand.u32 %v257, 4294901760
  %259 = vmatpush1.msra.mxu0 %v258
  %v260 = vand.u32 %v99, 4294901760
  %v261 = vsub.f32 %v99, %v260
  %v262 = vand.u32 %v261, 4294901760
  %v263 = vsub.f32 %v261, %v262
  %v264 = vand.u32 %v263, 4294901760
  %265 = vmatprep.subr.mxu0 %v264
  %v266 = vand.u32 %v98, 4294901760
  %v267 = vsub.f32 %v98, %v266
  %v268 = vand.u32 %v267, 4294901760
  %v269 = vsub.f32 %v267, %v268
  %v270 = vand.u32 %v269, 4294901760
  %271 = vmatpush1.msra.mxu0 %v270
  %v272 = vand.u32 %v101, 4294901760
  %v273 = vsub.f32 %v101, %v272
  %v274 = vand.u32 %v273, 4294901760
  %v275 = vsub.f32 %v273, %v274
  %v276 = vand.u32 %v275, 4294901760
  %277 = vmatprep.subr.mxu0 %v276
  %v278 = vand.u32 %v100, 4294901760
  %v279 = vsub.f32 %v100, %v278
  %v280 = vand.u32 %v279, 4294901760
  %v281 = vsub.f32 %v279, %v280
  %v282 = vand.u32 %v281, 4294901760
  %283 = vmatpush1.msra.mxu0 %v282
  %v284 = vand.u32 %v103, 4294901760
  %v285 = vsub.f32 %v103, %v284
  %v286 = vand.u32 %v285, 4294901760
  %v287 = vsub.f32 %v285, %v286
  %v288 = vand.u32 %v287, 4294901760
  %289 = vmatprep.subr.mxu0 %v288
  %v290 = vand.u32 %v102, 4294901760
  %v291 = vsub.f32 %v102, %v290
  %v292 = vand.u32 %v291, 4294901760
  %v293 = vsub.f32 %v291, %v292
  %v294 = vand.u32 %v293, 4294901760
  %295 = vmatpush1.msra.mxu0 %v294
  %v296 = vand.u32 %v105, 4294901760
  %v297 = vsub.f32 %v105, %v296
  %v298 = vand.u32 %v297, 4294901760
  %v299 = vsub.f32 %v297, %v298
  %v300 = vand.u32 %v299, 4294901760
  %301 = vmatprep.subr.mxu0 %v300
  %v302 = vand.u32 %v104, 4294901760
  %v303 = vsub.f32 %v104, %v302
  %v304 = vand.u32 %v303, 4294901760
  %v305 = vsub.f32 %v303, %v304
  %v306 = vand.u32 %v305, 4294901760
  %307 = vmatpush1.msra.mxu0 %v306
  %v308 = vand.u32 %v107, 4294901760
  %v309 = vsub.f32 %v107, %v308
  %v310 = vand.u32 %v309, 4294901760
  %v311 = vsub.f32 %v309, %v310
  %v312 = vand.u32 %v311, 4294901760
  %313 = vmatprep.subr.mxu0 %v312
  %v314 = vand.u32 %v106, 4294901760
  %v315 = vsub.f32 %v106, %v314
  %v316 = vand.u32 %v315, 4294901760
  %v317 = vsub.f32 %v315, %v316
  %v318 = vand.u32 %v317, 4294901760
  %319 = vmatpush1.msra.mxu0 %v318
  %v320 = vand.u32 %v109, 4294901760
  %v321 = vsub.f32 %v109, %v320
  %v322 = vand.u32 %v321, 4294901760
  %v323 = vsub.f32 %v321, %v322
  %v324 = vand.u32 %v323, 4294901760
  %325 = vmatprep.subr.mxu0 %v324
  %v326 = vand.u32 %v108, 4294901760
  %v327 = vsub.f32 %v108, %v326
  %v328 = vand.u32 %v327, 4294901760
  %v329 = vsub.f32 %v327, %v328
  %v330 = vand.u32 %v329, 4294901760
  %331 = vmatpush1.msra.mxu0 %v330
  %v332 = vand.u32 %v111, 4294901760
  %v333 = vsub.f32 %v111, %v332
  %v334 = vand.u32 %v333, 4294901760
  %v335 = vsub.f32 %v333, %v334
  %v336 = vand.u32 %v335, 4294901760
  %337 = vmatprep.subr.mxu0 %v336
  %v338 = vand.u32 %v110, 4294901760
  %v339 = vsub.f32 %v110, %v338
  %v340 = vand.u32 %v339, 4294901760
  %v341 = vsub.f32 %v339, %v340
  %v342 = vand.u32 %v341, 4294901760
  %343 = vmatpush1.msra.mxu0 %v342
  %344 = vmatprep.subr.mxu0 0.0
  %345 = vmatpush1.msra.mxu0 0.0
  %346 = vmatprep.subr.mxu0 0.0
  %347 = vmatpush1.msra.mxu0 0.0
  %348 = vmatprep.subr.mxu0 0.0
  %349 = vmatpush1.msra.mxu0 0.0
  %350 = vmatprep.subr.mxu0 0.0
  %351 = vmatpush1.msra.mxu0 0.0
  %352 = vmatprep.subr.mxu0 0.0
  %353 = vmatpush1.msra.mxu0 0.0
  %354 = vmatprep.subr.mxu0 0.0
  %355 = vmatpush1.msra.mxu0 0.0
  %356 = vmatprep.subr.mxu0 0.0
  %357 = vmatpush1.msra.mxu0 0.0
  %358 = vmatprep.subr.mxu0 0.0
  %359 = vmatpush1.msra.mxu0 0.0
  %360 = vmatprep.subr.mxu0 0.0
  %361 = vmatpush1.msra.mxu0 0.0
  %362 = vmatprep.subr.mxu0 0.0
  %363 = vmatpush1.msra.mxu0 0.0
  %364 = vmatprep.subr.mxu0 0.0
  %365 = vmatpush1.msra.mxu0 0.0
  %366 = vmatprep.subr.mxu0 0.0
  %367 = vmatpush1.msra.mxu0 0.0
  %368 = vmatprep.subr.mxu0 0.0
  %369 = vmatpush1.msra.mxu0 0.0
  %370 = vmatprep.subr.mxu0 0.0
  %371 = vmatpush1.msra.mxu0 0.0
  %372 = vmatprep.subr.mxu0 0.0
  %373 = vmatpush1.msra.mxu0 0.0
  %374 = vmatprep.subr.mxu0 0.0
  %375 = vmatpush1.msra.mxu0 0.0
  %376 = vmatprep.subr.mxu0 0.0
  %377 = vmatpush1.msra.mxu0 0.0
  %378 = vmatprep.subr.mxu0 0.0
  %379 = vmatpush1.msra.mxu0 0.0
  %380 = vmatprep.subr.mxu0 0.0
  %381 = vmatpush1.msra.mxu0 0.0
  %382 = vmatprep.subr.mxu0 0.0
  %383 = vmatpush1.msra.mxu0 0.0
  %384 = vmatprep.subr.mxu0 0.0
  %385 = vmatpush1.msra.mxu0 0.0
  %386 = vmatprep.subr.mxu0 0.0
  %387 = vmatpush1.msra.mxu0 0.0
  %388 = vmatprep.subr.mxu0 0.0
  %389 = vmatpush1.msra.mxu0 0.0
  %390 = vmatprep.mubr.f32.mxu0 0.0
  %v391 = vand.u32 %v126, 4294901760
  %392 = vmatmul.mubr.f32.gmra.mrb[0].mxu0 %v391
  %v393 = vpop.f32.mrb[0].mxu0
  %v394 = vadd.f32 %v221, %v393
  %v395 = vpop.f32.mrb[0].mxu0
  %v396 = vadd.f32 %v223, %v395
  %397 = vmatprep.mubr.f32.mxu0 0.0
  %v398 = vand.u32 %v129, 4294901760
  %399 = vmatmul.mubr.f32.gmra.mrb[0].mxu0 %v398
  %v400 = vpop.f32.mrb[0].mxu0
  %v401 = vadd.f32 %v232, %v400
  %v402 = vpop.f32.mrb[0].mxu0
  %v403 = vadd.f32 %v234, %v402
  %404 = vdwg.mxu0
  %v405 = vand.u32 %v95, 4294901760
  %v406 = vsub.f32 %v95, %v405
  %407 = vmatprep.subr.mxu0 %v406
  %v408 = vand.u32 %v94, 4294901760
  %v409 = vsub.f32 %v94, %v408
  %410 = vmatpush1.msra.mxu0 %v409
  %v411 = vand.u32 %v97, 4294901760
  %v412 = vsub.f32 %v97, %v411
  %413 = vmatprep.subr.mxu0 %v412
  %v414 = vand.u32 %v96, 4294901760
  %v415 = vsub.f32 %v96, %v414
  %416 = vmatpush1.msra.mxu0 %v415
  %v417 = vand.u32 %v99, 4294901760
  %v418 = vsub.f32 %v99, %v417
  %419 = vmatprep.subr.mxu0 %v418
  %v420 = vand.u32 %v98, 4294901760
  %v421 = vsub.f32 %v98, %v420
  %422 = vmatpush1.msra.mxu0 %v421
  %v423 = vand.u32 %v101, 4294901760
  %v424 = vsub.f32 %v101, %v423
  %425 = vmatprep.subr.mxu0 %v424
  %v426 = vand.u32 %v100, 4294901760
  %v427 = vsub.f32 %v100, %v426
  %428 = vmatpush1.msra.mxu0 %v427
  %v429 = vand.u32 %v103, 4294901760
  %v430 = vsub.f32 %v103, %v429
  %431 = vmatprep.subr.mxu0 %v430
  %v432 = vand.u32 %v102, 4294901760
  %v433 = vsub.f32 %v102, %v432
  %434 = vmatpush1.msra.mxu0 %v433
  %v435 = vand.u32 %v105, 4294901760
  %v436 = vsub.f32 %v105, %v435
  %437 = vmatprep.subr.mxu0 %v436
  %v438 = vand.u32 %v104, 4294901760
  %v439 = vsub.f32 %v104, %v438
  %440 = vmatpush1.msra.mxu0 %v439
  %v441 = vand.u32 %v107, 4294901760
  %v442 = vsub.f32 %v107, %v441
  %443 = vmatprep.subr.mxu0 %v442
  %v444 = vand.u32 %v106, 4294901760
  %v445 = vsub.f32 %v106, %v444
  %446 = vmatpush1.msra.mxu0 %v445
  %v447 = vand.u32 %v109, 4294901760
  %v448 = vsub.f32 %v109, %v447
  %449 = vmatprep.subr.mxu0 %v448
  %v450 = vand.u32 %v108, 4294901760
  %v451 = vsub.f32 %v108, %v450
  %452 = vmatpush1.msra.mxu0 %v451
  %v453 = vand.u32 %v111, 4294901760
  %v454 = vsub.f32 %v111, %v453
  %455 = vmatprep.subr.mxu0 %v454
  %v456 = vand.u32 %v110, 4294901760
  %v457 = vsub.f32 %v110, %v456
  %458 = vmatpush1.msra.mxu0 %v457
  %459 = vmatprep.subr.mxu0 0.0
  %460 = vmatpush1.msra.mxu0 0.0
  %461 = vmatprep.subr.mxu0 0.0
  %462 = vmatpush1.msra.mxu0 0.0
  %463 = vmatprep.subr.mxu0 0.0
  %464 = vmatpush1.msra.mxu0 0.0
  %465 = vmatprep.subr.mxu0 0.0
  %466 = vmatpush1.msra.mxu0 0.0
  %467 = vmatprep.subr.mxu0 0.0
  %468 = vmatpush1.msra.mxu0 0.0
  %469 = vmatprep.subr.mxu0 0.0
  %470 = vmatpush1.msra.mxu0 0.0
  %471 = vmatprep.subr.mxu0 0.0
  %472 = vmatpush1.msra.mxu0 0.0
  %473 = vmatprep.subr.mxu0 0.0
  %474 = vmatpush1.msra.mxu0 0.0
  %475 = vmatprep.subr.mxu0 0.0
  %476 = vmatpush1.msra.mxu0 0.0
  %477 = vmatprep.subr.mxu0 0.0
  %478 = vmatpush1.msra.mxu0 0.0
  %479 = vmatprep.subr.mxu0 0.0
  %480 = vmatpush1.msra.mxu0 0.0
  %481 = vmatprep.subr.mxu0 0.0
  %482 = vmatpush1.msra.mxu0 0.0
  %483 = vmatprep.subr.mxu0 0.0
  %484 = vmatpush1.msra.mxu0 0.0
  %485 = vmatprep.subr.mxu0 0.0
  %486 = vmatpush1.msra.mxu0 0.0
  %487 = vmatprep.subr.mxu0 0.0
  %488 = vmatpush1.msra.mxu0 0.0
  %489 = vmatprep.subr.mxu0 0.0
  %490 = vmatpush1.msra.mxu0 0.0
  %491 = vmatprep.subr.mxu0 0.0
  %492 = vmatpush1.msra.mxu0 0.0
  %493 = vmatprep.subr.mxu0 0.0
  %494 = vmatpush1.msra.mxu0 0.0
  %495 = vmatprep.subr.mxu0 0.0
  %496 = vmatpush1.msra.mxu0 0.0
  %497 = vmatprep.subr.mxu0 0.0
  %498 = vmatpush1.msra.mxu0 0.0
  %499 = vmatprep.subr.mxu0 0.0
  %500 = vmatpush1.msra.mxu0 0.0
  %501 = vmatprep.subr.mxu0 0.0
  %502 = vmatpush1.msra.mxu0 0.0
  %503 = vmatprep.subr.mxu0 0.0
  %504 = vmatpush1.msra.mxu0 0.0
  %505 = vmatprep.mubr.f32.mxu0 0.0
  %v506 = vand.u32 %v126, 4294901760
  %v507 = vsub.f32 %v126, %v506
  %508 = vmatmul.mubr.f32.gmra.mrb[0].mxu0 %v507
  %v509 = vpop.f32.mrb[0].mxu0
  %v510 = vadd.f32 %v394, %v509
  %v511 = vpop.f32.mrb[0].mxu0
  %v512 = vadd.f32 %v396, %v511
  %513 = vmatprep.mubr.f32.mxu0 0.0
  %v514 = vand.u32 %v129, 4294901760
  %v515 = vsub.f32 %v129, %v514
  %516 = vmatmul.mubr.f32.gmra.mrb[0].mxu0 %v515
  %v517 = vpop.f32.mrb[0].mxu0
  %v518 = vadd.f32 %v401, %v517
  %v519 = vpop.f32.mrb[0].mxu0
  %v520 = vadd.f32 %v403, %v519
  %521 = vdwg.mxu0
  %v522 = vand.u32 %v95, 4294901760
  %523 = vmatprep.subr.mxu0 %v522
  %v524 = vand.u32 %v94, 4294901760
  %525 = vmatpush1.msra.mxu0 %v524
  %v526 = vand.u32 %v97, 4294901760
  %527 = vmatprep.subr.mxu0 %v526
  %v528 = vand.u32 %v96, 4294901760
  %529 = vmatpush1.msra.mxu0 %v528
  %v530 = vand.u32 %v99, 4294901760
  %531 = vmatprep.subr.mxu0 %v530
  %v532 = vand.u32 %v98, 4294901760
  %533 = vmatpush1.msra.mxu0 %v532
  %v534 = vand.u32 %v101, 4294901760
  %535 = vmatprep.subr.mxu0 %v534
  %v536 = vand.u32 %v100, 4294901760
  %537 = vmatpush1.msra.mxu0 %v536
  %v538 = vand.u32 %v103, 4294901760
  %539 = vmatprep.subr.mxu0 %v538
  %v540 = vand.u32 %v102, 4294901760
  %541 = vmatpush1.msra.mxu0 %v540
  %v542 = vand.u32 %v105, 4294901760
  %543 = vmatprep.subr.mxu0 %v542
  %v544 = vand.u32 %v104, 4294901760
  %545 = vmatpush1.msra.mxu0 %v544
  %v546 = vand.u32 %v107, 4294901760
  %547 = vmatprep.subr.mxu0 %v546
  %v548 = vand.u32 %v106, 4294901760
  %549 = vmatpush1.msra.mxu0 %v548
  %v550 = vand.u32 %v109, 4294901760
  %551 = vmatprep.subr.mxu0 %v550
  %v552 = vand.u32 %v108, 4294901760
  %553 = vmatpush1.msra.mxu0 %v552
  %v554 = vand.u32 %v111, 4294901760
  %555 = vmatprep.subr.mxu0 %v554
  %v556 = vand.u32 %v110, 4294901760
  %557 = vmatpush1.msra.mxu0 %v556
  %558 = vmatprep.subr.mxu0 0.0
  %559 = vmatpush1.msra.mxu0 0.0
  %560 = vmatprep.subr.mxu0 0.0
  %561 = vmatpush1.msra.mxu0 0.0
  %562 = vmatprep.subr.mxu0 0.0
  %563 = vmatpush1.msra.mxu0 0.0
  %564 = vmatprep.subr.mxu0 0.0
  %565 = vmatpush1.msra.mxu0 0.0
  %566 = vmatprep.subr.mxu0 0.0
  %567 = vmatpush1.msra.mxu0 0.0
  %568 = vmatprep.subr.mxu0 0.0
  %569 = vmatpush1.msra.mxu0 0.0
  %570 = vmatprep.subr.mxu0 0.0
  %571 = vmatpush1.msra.mxu0 0.0
  %572 = vmatprep.subr.mxu0 0.0
  %573 = vmatpush1.msra.mxu0 0.0
  %574 = vmatprep.subr.mxu0 0.0
  %575 = vmatpush1.msra.mxu0 0.0
  %576 = vmatprep.subr.mxu0 0.0
  %577 = vmatpush1.msra.mxu0 0.0
  %578 = vmatprep.subr.mxu0 0.0
  %579 = vmatpush1.msra.mxu0 0.0
  %580 = vmatprep.subr.mxu0 0.0
  %581 = vmatpush1.msra.mxu0 0.0
  %582 = vmatprep.subr.mxu0 0.0
  %583 = vmatpush1.msra.mxu0 0.0
  %584 = vmatprep.subr.mxu0 0.0
  %585 = vmatpush1.msra.mxu0 0.0
  %586 = vmatprep.subr.mxu0 0.0
  %587 = vmatpush1.msra.mxu0 0.0
  %588 = vmatprep.subr.mxu0 0.0
  %589 = vmatpush1.msra.mxu0 0.0
  %590 = vmatprep.subr.mxu0 0.0
  %591 = vmatpush1.msra.mxu0 0.0
  %592 = vmatprep.subr.mxu0 0.0
  %593 = vmatpush1.msra.mxu0 0.0
  %594 = vmatprep.subr.mxu0 0.0
  %595 = vmatpush1.msra.mxu0 0.0
  %596 = vmatprep.subr.mxu0 0.0
  %597 = vmatpush1.msra.mxu0 0.0
  %598 = vmatprep.subr.mxu0 0.0
  %599 = vmatpush1.msra.mxu0 0.0
  %600 = vmatprep.subr.mxu0 0.0
  %601 = vmatpush1.msra.mxu0 0.0
  %602 = vmatprep.subr.mxu0 0.0
  %603 = vmatpush1.msra.mxu0 0.0
  %604 = vmatprep.mubr.f32.mxu0 0.0
  %v605 = vand.u32 %v126, 4294901760
  %v606 = vsub.f32 %v126, %v605
  %v607 = vand.u32 %v606, 4294901760
  %608 = vmatmul.mubr.f32.gmra.mrb[0].mxu0 %v607
  %v609 = vpop.f32.mrb[0].mxu0
  %v610 = vadd.f32 %v510, %v609
  %v611 = vpop.f32.mrb[0].mxu0
  %v612 = vadd.f32 %v512, %v611
  %613 = vmatprep.mubr.f32.mxu0 0.0
  %v614 = vand.u32 %v129, 4294901760
  %v615 = vsub.f32 %v129, %v614
  %v616 = vand.u32 %v615, 4294901760
  %617 = vmatmul.mubr.f32.gmra.mrb[0].mxu0 %v616
  %v618 = vpop.f32.mrb[0].mxu0
  %v619 = vadd.f32 %v518, %v618
  %v620 = vpop.f32.mrb[0].mxu0
  %v621 = vadd.f32 %v520, %v620
  %622 = vdwg.mxu0
  %v623 = vand.u32 %v95, 4294901760
  %v624 = vsub.f32 %v95, %v623
  %v625 = vand.u32 %v624, 4294901760
  %626 = vmatprep.subr.mxu0 %v625
  %v627 = vand.u32 %v94, 4294901760
  %v628 = vsub.f32 %v94, %v627
  %v629 = vand.u32 %v628, 4294901760
  %630 = vmatpush1.msra.mxu0 %v629
  %v631 = vand.u32 %v97, 4294901760
  %v632 = vsub.f32 %v97, %v631
  %v633 = vand.u32 %v632, 4294901760
  %634 = vmatprep.subr.mxu0 %v633
  %v635 = vand.u32 %v96, 4294901760
  %v636 = vsub.f32 %v96, %v635
  %v637 = vand.u32 %v636, 4294901760
  %638 = vmatpush1.msra.mxu0 %v637
  %v639 = vand.u32 %v99, 4294901760
  %v640 = vsub.f32 %v99, %v639
  %v641 = vand.u32 %v640, 4294901760
  %642 = vmatprep.subr.mxu0 %v641
  %v643 = vand.u32 %v98, 4294901760
  %v644 = vsub.f32 %v98, %v643
  %v645 = vand.u32 %v644, 4294901760
  %646 = vmatpush1.msra.mxu0 %v645
  %v647 = vand.u32 %v101, 4294901760
  %v648 = vsub.f32 %v101, %v647
  %v649 = vand.u32 %v648, 4294901760
  %650 = vmatprep.subr.mxu0 %v649
  %v651 = vand.u32 %v100, 4294901760
  %v652 = vsub.f32 %v100, %v651
  %v653 = vand.u32 %v652, 4294901760
  %654 = vmatpush1.msra.mxu0 %v653
  %v655 = vand.u32 %v103, 4294901760
  %v656 = vsub.f32 %v103, %v655
  %v657 = vand.u32 %v656, 4294901760
  %658 = vmatprep.subr.mxu0 %v657
  %v659 = vand.u32 %v102, 4294901760
  %v660 = vsub.f32 %v102, %v659
  %v661 = vand.u32 %v660, 4294901760
  %662 = vmatpush1.msra.mxu0 %v661
  %v663 = vand.u32 %v105, 4294901760
  %v664 = vsub.f32 %v105, %v663
  %v665 = vand.u32 %v664, 4294901760
  %666 = vmatprep.subr.mxu0 %v665
  %v667 = vand.u32 %v104, 4294901760
  %v668 = vsub.f32 %v104, %v667
  %v669 = vand.u32 %v668, 4294901760
  %670 = vmatpush1.msra.mxu0 %v669
  %v671 = vand.u32 %v107, 4294901760
  %v672 = vsub.f32 %v107, %v671
  %v673 = vand.u32 %v672, 4294901760
  %674 = vmatprep.subr.mxu0 %v673
  %v675 = vand.u32 %v106, 4294901760
  %v676 = vsub.f32 %v106, %v675
  %v677 = vand.u32 %v676, 4294901760
  %678 = vmatpush1.msra.mxu0 %v677
  %v679 = vand.u32 %v109, 4294901760
  %v680 = vsub.f32 %v109, %v679
  %v681 = vand.u32 %v680, 4294901760
  %682 = vmatprep.subr.mxu0 %v681
  %v683 = vand.u32 %v108, 4294901760
  %v684 = vsub.f32 %v108, %v683
  %v685 = vand.u32 %v684, 4294901760
  %686 = vmatpush1.msra.mxu0 %v685
  %v687 = vand.u32 %v111, 4294901760
  %v688 = vsub.f32 %v111, %v687
  %v689 = vand.u32 %v688, 4294901760
  %690 = vmatprep.subr.mxu0 %v689
  %v691 = vand.u32 %v110, 4294901760
  %v692 = vsub.f32 %v110, %v691
  %v693 = vand.u32 %v692, 4294901760
  %694 = vmatpush1.msra.mxu0 %v693
  %695 = vmatprep.subr.mxu0 0.0
  %696 = vmatpush1.msra.mxu0 0.0
  %697 = vmatprep.subr.mxu0 0.0
  %698 = vmatpush1.msra.mxu0 0.0
  %699 = vmatprep.subr.mxu0 0.0
  %700 = vmatpush1.msra.mxu0 0.0
  %701 = vmatprep.subr.mxu0 0.0
  %702 = vmatpush1.msra.mxu0 0.0
  %703 = vmatprep.subr.mxu0 0.0
  %704 = vmatpush1.msra.mxu0 0.0
  %705 = vmatprep.subr.mxu0 0.0
  %706 = vmatpush1.msra.mxu0 0.0
  %707 = vmatprep.subr.mxu0 0.0
  %708 = vmatpush1.msra.mxu0 0.0
  %709 = vmatprep.subr.mxu0 0.0
  %710 = vmatpush1.msra.mxu0 0.0
  %711 = vmatprep.subr.mxu0 0.0
  %712 = vmatpush1.msra.mxu0 0.0
  %713 = vmatprep.subr.mxu0 0.0
  %714 = vmatpush1.msra.mxu0 0.0
  %715 = vmatprep.subr.mxu0 0.0
  %716 = vmatpush1.msra.mxu0 0.0
  %717 = vmatprep.subr.mxu0 0.0
  %718 = vmatpush1.msra.mxu0 0.0
  %719 = vmatprep.subr.mxu0 0.0
  %720 = vmatpush1.msra.mxu0 0.0
  %721 = vmatprep.subr.mxu0 0.0
  %722 = vmatpush1.msra.mxu0 0.0
  %723 = vmatprep.subr.mxu0 0.0
  %724 = vmatpush1.msra.mxu0 0.0
  %725 = vmatprep.subr.mxu0 0.0
  %726 = vmatpush1.msra.mxu0 0.0
  %727 = vmatprep.subr.mxu0 0.0
  %728 = vmatpush1.msra.mxu0 0.0
  %729 = vmatprep.subr.mxu0 0.0
  %730 = vmatpush1.msra.mxu0 0.0
  %731 = vmatprep.subr.mxu0 0.0
  %732 = vmatpush1.msra.mxu0 0.0
  %733 = vmatprep.subr.mxu0 0.0
  %734 = vmatpush1.msra.mxu0 0.0
  %735 = vmatprep.subr.mxu0 0.0
  %736 = vmatpush1.msra.mxu0 0.0
  %737 = vmatprep.subr.mxu0 0.0
  %738 = vmatpush1.msra.mxu0 0.0
  %739 = vmatprep.subr.mxu0 0.0
  %740 = vmatpush1.msra.mxu0 0.0
  %741 = vmatprep.mubr.f32.mxu0 0.0
  %v742 = vand.u32 %v126, 4294901760
  %743 = vmatmul.mubr.f32.gmra.mrb[0].mxu0 %v742
  %v744 = vpop.f32.mrb[0].mxu0
  %v745 = vadd.f32 %v610, %v744
  %v746 = vpop.f32.mrb[0].mxu0
  %v747 = vadd.f32 %v612, %v746
  %748 = vmatprep.mubr.f32.mxu0 0.0
  %v749 = vand.u32 %v129, 4294901760
  %750 = vmatmul.mubr.f32.gmra.mrb[0].mxu0 %v749
  %v751 = vpop.f32.mrb[0].mxu0
  %v752 = vadd.f32 %v619, %v751
  %v753 = vpop.f32.mrb[0].mxu0
  %v754 = vadd.f32 %v621, %v753
  %755 = vdwg.mxu0
  %v756 = vand.u32 %v95, 4294901760
  %757 = vmatprep.subr.mxu0 %v756
  %v758 = vand.u32 %v94, 4294901760
  %759 = vmatpush1.msra.mxu0 %v758
  %v760 = vand.u32 %v97, 4294901760
  %761 = vmatprep.subr.mxu0 %v760
  %v762 = vand.u32 %v96, 4294901760
  %763 = vmatpush1.msra.mxu0 %v762
  %v764 = vand.u32 %v99, 4294901760
  %765 = vmatprep.subr.mxu0 %v764
  %v766 = vand.u32 %v98, 4294901760
  %767 = vmatpush1.msra.mxu0 %v766
  %v768 = vand.u32 %v101, 4294901760
  %769 = vmatprep.subr.mxu0 %v768
  %v770 = vand.u32 %v100, 4294901760
  %771 = vmatpush1.msra.mxu0 %v770
  %v772 = vand.u32 %v103, 4294901760
  %773 = vmatprep.subr.mxu0 %v772
  %v774 = vand.u32 %v102, 4294901760
  %775 = vmatpush1.msra.mxu0 %v774
  %v776 = vand.u32 %v105, 4294901760
  %777 = vmatprep.subr.mxu0 %v776
  %v778 = vand.u32 %v104, 4294901760
  %779 = vmatpush1.msra.mxu0 %v778
  %v780 = vand.u32 %v107, 4294901760
  %781 = vmatprep.subr.mxu0 %v780
  %v782 = vand.u32 %v106, 4294901760
  %783 = vmatpush1.msra.mxu0 %v782
  %v784 = vand.u32 %v109, 4294901760
  %785 = vmatprep.subr.mxu0 %v784
  %v786 = vand.u32 %v108, 4294901760
  %787 = vmatpush1.msra.mxu0 %v786
  %v788 = vand.u32 %v111, 4294901760
  %789 = vmatprep.subr.mxu0 %v788
  %v790 = vand.u32 %v110, 4294901760
  %791 = vmatpush1.msra.mxu0 %v790
  %792 = vmatprep.subr.mxu0 0.0
  %793 = vmatpush1.msra.mxu0 0.0
  %794 = vmatprep.subr.mxu0 0.0
  %795 = vmatpush1.msra.mxu0 0.0
  %796 = vmatprep.subr.mxu0 0.0
  %797 = vmatpush1.msra.mxu0 0.0
  %798 = vmatprep.subr.mxu0 0.0
  %799 = vmatpush1.msra.mxu0 0.0
  %800 = vmatprep.subr.mxu0 0.0
  %801 = vmatpush1.msra.mxu0 0.0
  %802 = vmatprep.subr.mxu0 0.0
  %803 = vmatpush1.msra.mxu0 0.0
  %804 = vmatprep.subr.mxu0 0.0
  %805 = vmatpush1.msra.mxu0 0.0
  %806 = vmatprep.subr.mxu0 0.0
  %807 = vmatpush1.msra.mxu0 0.0
  %808 = vmatprep.subr.mxu0 0.0
  %809 = vmatpush1.msra.mxu0 0.0
  %810 = vmatprep.subr.mxu0 0.0
  %811 = vmatpush1.msra.mxu0 0.0
  %812 = vmatprep.subr.mxu0 0.0
  %813 = vmatpush1.msra.mxu0 0.0
  %814 = vmatprep.subr.mxu0 0.0
  %815 = vmatpush1.msra.mxu0 0.0
  %816 = vmatprep.subr.mxu0 0.0
  %817 = vmatpush1.msra.mxu0 0.0
  %818 = vmatprep.subr.mxu0 0.0
  %819 = vmatpush1.msra.mxu0 0.0
  %820 = vmatprep.subr.mxu0 0.0
  %821 = vmatpush1.msra.mxu0 0.0
  %822 = vmatprep.subr.mxu0 0.0
  %823 = vmatpush1.msra.mxu0 0.0
  %824 = vmatprep.subr.mxu0 0.0
  %825 = vmatpush1.msra.mxu0 0.0
  %826 = vmatprep.subr.mxu0 0.0
  %827 = vmatpush1.msra.mxu0 0.0
  %828 = vmatprep.subr.mxu0 0.0
  %829 = vmatpush1.msra.mxu0 0.0
  %830 = vmatprep.subr.mxu0 0.0
  %831 = vmatpush1.msra.mxu0 0.0
  %832 = vmatprep.subr.mxu0 0.0
  %833 = vmatpush1.msra.mxu0 0.0
  %834 = vmatprep.subr.mxu0 0.0
  %835 = vmatpush1.msra.mxu0 0.0
  %836 = vmatprep.subr.mxu0 0.0
  %837 = vmatpush1.msra.mxu0 0.0
  %838 = vmatprep.mubr.f32.mxu0 0.0
  %v839 = vand.u32 %v126, 4294901760
  %840 = vmatmul.mubr.f32.gmra.mrb[0].mxu0 %v839
  %v841 = vpop.f32.mrb[0].mxu0
  %v842 = vadd.f32 %v745, %v841
  %v843 = vpop.f32.mrb[0].mxu0
  %v844 = vadd.f32 %v747, %v843
  %845 = vmatprep.mubr.f32.mxu0 0.0
  %v846 = vand.u32 %v129, 4294901760
  %847 = vmatmul.mubr.f32.gmra.mrb[0].mxu0 %v846
  %v848 = vpop.f32.mrb[0].mxu0
  %v849 = vadd.f32 %v752, %v848
  %v850 = vpop.f32.mrb[0].mxu0
  %v851 = vadd.f32 %v754, %v850
  %852 = vdwg.mxu0
  %vm853 = vcmp.ge.f32.partialorder %v842, 0.0
  %vm854 = vcmp.ge.f32.partialorder %v844, 0.0
  %vm855 = vcmp.ge.f32.partialorder %v849, 0.0
  %vm856 = vcmp.ge.f32.partialorder %v851, 0.0
  %v857 = vmul.f32 %v842, 0.2
  %v858 = vmul.f32 %v844, 0.2
  %v859 = vmul.f32 %v849, 0.2
  %v860 = vmul.f32 %v851, 0.2
  %v861 = vsel %vm853, %v842, %v857
  %v862 = vsel %vm854, %v844, %v858
  %v863 = vsel %vm855, %v849, %v859
  %v864 = vsel %vm856, %v851, %v860
  %v865 = vmul.f32 %v861, 1.4142135
  %v866 = vmul.f32 %v862, 1.4142135
  %v867 = vmul.f32 %v863, 1.4142135
  %v868 = vmul.f32 %v864, 1.4142135
  %869 = vst [vmem:[%s3] sm:$0xff] %v865
  %870 = vst [vmem:[%s3 + $0x8] sm:$0xff] %v866
  %871 = vst [vmem:[%s3 + $0x10] sm:$0xff] %v867
  %872 = vst [vmem:[%s3 + $0x18] sm:$0xff] %v868
  // Predicated region
  $region14: #{_lambda_.1} parent=0 // pred_check
    _
  $region15: #{_lambda_.1} parent=0 // pred_check_branch
    %874 = sbr.rel (0) target = $region17
  $region16: #{_lambda_.1} parent=0 // pred_region
    _
  $region17: #{_lambda_.1} parent=0 // pred_fallthru
    _
  // Predicated region
  $region18: #{_lambda_.1} parent=0 // pred_check
    _
  $region19: #{_lambda_.1} parent=0 // pred_check_branch
    %876 = sbr.rel (0) target = $region21
  $region20: #{_lambda_.1} parent=0 // pred_region
    _
  $region21: #{_lambda_.1} parent=0 // pred_fallthru
    _

</llo_original>
